<compile_context>
chip_gen: v5e
topology: v5e:2x2
jax: 0.10.0
libtpu: 0.0.40
codegen_flags: <defaults>
</compile_context>

<pallas_src>
import jax
import jax.numpy as jnp
from jax.experimental import pallas as pl
from jax.experimental.pallas import tpu as pltpu

_LANE = 128           # vreg lane width; tile widths stay multiples of this
_TN_MAX = 4096        # max N-tile width for the large-F streaming path
_SINGLE_TILE_MAX = 8192  # up to this many output lanes, use one block / one step


def _matmul_kernel(a_ref, b_ref, o_ref):
    # a_ref: (M, K), b_ref: (K, tn), o_ref: (M, tn) -- one MXU matmul per step.
    o_ref[...] = jnp.dot(
        a_ref[...], b_ref[...], preferred_element_type=jnp.float32
    ).astype(o_ref.dtype)


def _round_up(x, m):
    return ((x + m - 1) // m) * m


def pallas_matmul(a, b):
    """a: (M, K), b: (K, N) -> (M, N).

    K is small (32) so no K accumulation is needed.  For small/moderate N a
    single full-block call is used (no padding, no slicing).  For large N the
    output is tiled along N with lane-dense (multiple-of-128) tiles; the tile
    count is rounded to an even number so the "parallel" grid axis balances
    across v7x's two TensorCores.  The ragged final tile (if any) is handled
    by Pallas' masked edge loads/stores -- no zero-padded copy of B is ever
    materialized, and nothing is reduced across N, so no garbage can leak.
    """
    M, K = a.shape
    K2, N = b.shape
    assert K == K2, (a.shape, b.shape)
    out_dtype = jnp.result_type(a.dtype, b.dtype)

    if N <= _SINGLE_TILE_MAX:
        tn = N                       # full block; grid=(1,)
        num_tiles = 1
    else:
        num_tiles = pl.cdiv(N, _TN_MAX)
        if num_tiles % 2:            # even tile count -> 2 TCs split cleanly (v7x)
            num_tiles += 1
        tn = _round_up(pl.cdiv(N, num_tiles), _LANE)   # lane-dense tile width
        num_tiles = pl.cdiv(N, tn)

    cost = pl.CostEstimate(
        flops=2 * M * K * N,
        transcendentals=0,
        bytes_accessed=(M * K * a.dtype.itemsize
                        + K * N * b.dtype.itemsize
                        + M * N * jnp.dtype(out_dtype).itemsize),
    )

    return pl.pallas_call(
        _matmul_kernel,
        out_shape=jax.ShapeDtypeStruct((M, N), out_dtype),
        grid=(num_tiles,),
        in_specs=[
            pl.BlockSpec((M, K), lambda j: (0, 0),
                         memory_space=pltpu.MemorySpace.VMEM),
            pl.BlockSpec((K, tn), lambda j: (0, j),
                         memory_space=pltpu.MemorySpace.VMEM),
        ],
        out_specs=pl.BlockSpec((M, tn), lambda j: (0, j),
                               memory_space=pltpu.MemorySpace.VMEM),
        compiler_params=pltpu.CompilerParams(
            dimension_semantics=("parallel",),   # N tiles across TCs (v7x megacore)
        ),
        cost_estimate=cost,
    )(a, b)


@jax.jit
def model_forward(x0, x1):
    """Pallas equivalent of Model.forward.

    x0: (1, 10, 32) mask_info
    x1: (B, 32, F)  -> ptotos = x1[0].reshape(32, -1)
    returns: (1, 10, F)   (torch.matmul 3D @ 2D broadcasting)
    """
    mask_info = x0
    ptotos = x1[0].reshape(32, -1)             # view(32, -1)
    b, m, k = mask_info.shape                  # (1, 10, 32)
    a2d = mask_info.reshape(b * m, k)          # collapse leading batch dim
    out2d = pallas_matmul(a2d, ptotos)         # (b*m, F)
    return out2d.reshape(b, m, -1)


if __name__ == "__main__":
    key = jax.random.PRNGKey(0)
    k0, k1 = jax.random.split(key)
    # Shapes consistent with the module: mask_info (1, 10, 32); x1 whose first
    # element flattens to (32, F) with F = 64.
    x0 = jax.random.uniform(k0, (1, 10, 32), dtype=jnp.float32)
    x1 = jax.random.uniform(k1, (2, 32, 64), dtype=jnp.float32)

    out = model_forward(x0, x1)
    jax.block_until_ready(out)

    # Reference check in plain JAX (same semantics as torch.matmul broadcast).
    ref = jnp.matmul(x0, x1[0].reshape(32, -1))
    assert out.shape == (1, 10, 64), out.shape
    assert jnp.allclose(out, ref, atol=1e-5, rtol=1e-5)
    print("KERNEL_OK")
</pallas_src>

<mosaic_0001>
module attributes {stable_mosaic.version = 11 : i64} {
  func.func @_matmul_kernel(%arg0: i32, %arg1: memref<10x32xf32, #tpu.memory_space<vmem>>, %arg2: memref<32x64xf32, #tpu.memory_space<vmem>>, %arg3: memref<10x64xf32, #tpu.memory_space<vmem>>) attributes {dimension_semantics = [#tpu.dimension_semantics<parallel>], iteration_bounds = array<i64: 1>, scalar_prefetch = 0 : i64, scratch_operands = 0 : i64, tpu.core_type = #tpu.core_type<tc>, window_params = [{pipeline_mode = #tpu.pipeline_mode<synchronous>, transform_indices = @transform_0, window_bounds = array<i64: 10, 32>}, {transform_indices = @transform_1, window_bounds = array<i64: 32, 64>}, {transform_indices = @transform_2, window_bounds = array<i64: 10, 64>}]} {
    %c0 = arith.constant 0 : index
    %c0_0 = arith.constant 0 : index
    %0 = vector.load %arg1[%c0, %c0_0] : memref<10x32xf32, #tpu.memory_space<vmem>>, vector<10x32xf32>
    %c0_1 = arith.constant 0 : index
    %c0_2 = arith.constant 0 : index
    %1 = vector.load %arg2[%c0_1, %c0_2] : memref<32x64xf32, #tpu.memory_space<vmem>>, vector<32x64xf32>
    %cst = arith.constant dense<0.000000e+00> : vector<10x64xf32>
    %2 = tpu.matmul %0, %1, %cst {dimension_numbers = #tpu.dot_dimension_numbers<[1], [0], [0], [1], [0, 0, 1, 1], [], []>} : vector<10x32xf32>, vector<32x64xf32>, vector<10x64xf32> -> vector<10x64xf32>
    %c0_3 = arith.constant 0 : index
    %c0_4 = arith.constant 0 : index
    %3 = vector.load %arg3[%c0_3, %c0_4] : memref<10x64xf32, #tpu.memory_space<vmem>>, vector<10x64xf32>
    tpu.vector_store %arg3[%c0_3, %c0_4], %2 {strides = array<i32>} : memref<10x64xf32, #tpu.memory_space<vmem>>, vector<10x64xf32>,
    return
  }
  func.func @transform_0(%arg0: i32) -> (i32, i32) {
    %c0_i32 = arith.constant 0 : i32
    %c0_i32_0 = arith.constant 0 : i32
    %c0_i32_1 = arith.constant 0 : i32
    return %c0_i32, %c0_i32_0 : i32, i32
  }
  func.func @transform_1(%arg0: i32) -> (i32, i32) {
    %c0_i32 = arith.constant 0 : i32
    %c0_i32_0 = arith.constant 0 : i32
    return %c0_i32, %arg0 : i32, i32
  }
  func.func @transform_2(%arg0: i32) -> (i32, i32) {
    %c0_i32 = arith.constant 0 : i32
    %c0_i32_0 = arith.constant 0 : i32
    return %c0_i32, %arg0 : i32, i32
  }
}

</mosaic_0001>

<llo_original>
// kernel: model_forward.1
$region0: #{model_forward.1}
  #allocation0 [shape = 'u32[]', space=smem, size = 0x4, offset = 0x4, fixed_abs, tag = 'smem constant byte address 0x4 - core index']
  #allocation1 [shape = 'u32[72,128]{1,0:T(1,128)}', space=vmem, size = 0x9000, scoped, tag = 'internal scratch']
  %s0 = inlined_call_operand.vmem [shape: f32[10,32], index: 0, kind: input, shape index: {}]
  %s1 = inlined_call_operand.vmem [shape: f32[32,64], index: 1, kind: input, shape index: {}]
  %s2 = inlined_call_operand.vmem [shape: f32[10,64], index: 2, kind: output, shape index: {}]
  %s3 = sld [smem:[#allocation0]]
  $region18: #{model_forward.1} parent=0
    _
  %s5 = ssub.s32 1, %s3
  %s6 = scalar_select 0, %s5, %s3
  // Predicated region
  $region2: #{model_forward.1} parent=0 // pred_check
    _
  $region3: #{model_forward.1} parent=0 // pred_check_branch
    %8 = sbr.rel (0) target = $region5
  $region4: #{model_forward.1} parent=0 // pred_region
    _
  $region5: #{model_forward.1} parent=0 // pred_fallthru
    _
  // Predicated region
  $region6: #{model_forward.1} parent=0 // pred_check
    _
  $region7: #{model_forward.1} parent=0 // pred_check_branch
    %10 = sbr.rel (0) target = $region9
  $region8: #{model_forward.1} parent=0 // pred_region
    _
  $region9: #{model_forward.1} parent=0 // pred_fallthru
    _
  %v11 = vld [vmem:[%s0] sm:$0xff]
  %v12 = vld [vmem:[%s0 + $0x8] sm:$0x3]
  %v13 = vld [vmem:[%s1] sm:$0xff]
  %v14 = vld [vmem:[%s1 + $0x8] sm:$0xff]
  %v15 = vld [vmem:[%s1 + $0x10] sm:$0xff]
  %v16 = vld [vmem:[%s1 + $0x18] sm:$0xff]
  %vm17 = vcmask 261120
  %v19 = vsel %vm17, %v11, 0
  %v22 = vsel %vm17, %v12, 0
  %24 = vmatpush.msra.mxu0 0.0
  %25 = vmatpush.msra.mxu0 0.0
  %26 = vmatpush.msra.mxu0 0.0
  %27 = vmatpush.msra.mxu0 0.0
  %28 = vmatpush.msra.mxu0 0.0
  %29 = vmatpush.msra.mxu0 0.0
  %30 = vmatpush.msra.mxu0 0.0
  %31 = vmatpush.msra.mxu0 0.0
  %32 = vmatpush.msra.mxu0 0.0
  %33 = vmatpush.msra.mxu0 0.0
  %34 = vmatpush.msra.mxu0 0.0
  %35 = vmatpush.msra.mxu0 0.0
  %36 = vmatpush.msra.mxu0 %v16
  %37 = vmatpush.msra.mxu0 %v15
  %38 = vmatpush.msra.mxu0 %v14
  %39 = vmatpush.msra.mxu0 %v13
  %40 = vmatmul.f32.gmra.mxu0 %v19
  %v41 = vpop.f32.mrf.mxu0
  %v42 = vadd.f32 0.0, %v41
  %43 = vmatmul.f32.gmra.mxu0 %v22
  %v44 = vpop.f32.mrf.mxu0
  %v45 = vadd.f32 0.0, %v44
  %46 = vdwg.mxu0
  %vm47 = vcmask 523264
  %48 = vst.msk [vmem:[%s2] sm:$0xff] %vm47, %v42
  %vm49 = vcmask 517120
  %50 = vst.msk [vmem:[%s2 + $0x8] sm:$0x3] %vm49, %v45
  // Predicated region
  $region10: #{model_forward.1} parent=0 // pred_check
    _
  $region11: #{model_forward.1} parent=0 // pred_check_branch
    %52 = sbr.rel (0) target = $region13
  $region12: #{model_forward.1} parent=0 // pred_region
    _
  $region13: #{model_forward.1} parent=0 // pred_fallthru
    _
  // Predicated region
  $region14: #{model_forward.1} parent=0 // pred_check
    _
  $region15: #{model_forward.1} parent=0 // pred_check_branch
    %54 = sbr.rel (0) target = $region17
  $region16: #{model_forward.1} parent=0 // pred_region
    _
  $region17: #{model_forward.1} parent=0 // pred_fallthru
    _

</llo_original>
